<compile_context>
chip_gen: v5e
topology: v5e:2x2
jax: 0.10.0
libtpu: 0.0.40
codegen_flags: <defaults>
</compile_context>

<pallas_src>
import functools

import jax
import jax.numpy as jnp
from jax.experimental import pallas as pl
from jax.experimental.pallas import tpu as pltpu


def _round_up(n, m):
    return ((n + m - 1) // m) * m


def _cdiv(a, b):
    return (a + b - 1) // b


def actor_critic_kernel(x_ref, b_ref, wx_ref, wb_ref, bias_ref, out_ref, *,
                        action_dim):
    # x_ref    : [Bt, S]      batch tile of the (channel-squeezed) series
    # b_ref    : [Bt, 2]      extra features (torch.cat((features, b), -1))
    # wx_ref   : [S, OUT_W]   pre-composed (model linear @ heads) weight
    # wb_ref   : [2, OUT_W]   heads weight acting directly on b
    # bias_ref : [1, OUT_W]   pre-composed bias row
    # out_ref  : [Bt, OUT_W]  lanes [0, A) = action probs, lane A = value
    h = (jnp.dot(x_ref[...], wx_ref[...], preferred_element_type=jnp.float32)
         + jnp.dot(b_ref[...], wb_ref[...], preferred_element_type=jnp.float32)
         + bias_ref[...])

    # Masked softmax over the first `action_dim` lanes; lane `action_dim`
    # carries the critic value and is passed through untouched.
    lane = jax.lax.broadcasted_iota(jnp.int32, h.shape, 1)
    is_logit = lane < action_dim
    masked = jnp.where(is_logit, h, -jnp.inf)
    m = jnp.max(masked, axis=-1, keepdims=True)
    e = jnp.exp(masked - m)                          # 0 on non-logit lanes
    probs = e / jnp.sum(e, axis=-1, keepdims=True)   # exact reciprocal

    out_ref[...] = jnp.where(is_logit, probs, h).astype(out_ref.dtype)


def pack_params(params, seq_len, pred_len, action_dim):
    """One-time host-side packing: transpose, stack heads, pre-compose layers."""
    S, P, A = seq_len, pred_len, action_dim
    assert A >= 1, "softmax over zero actions would produce NaN rows"
    wm = params["wm"]                 # [P, S]   model: Linear(S -> P)
    bm = params["bm"].reshape(P)      # [P]
    wa = params["wa"]                 # [A, P+2] actor
    ba = params["ba"].reshape(A)      # [A]
    wc = params["wc"].reshape(P + 2)  # [P+2]    critic
    bc = params["bc"].reshape(())     # []

    out_w = _round_up(A + 1, 128)     # lane-dense output width

    # Fused head weight over [features(P) | b(2)] -> [logits(A) | value | 0..]
    head_w = jnp.zeros((P + 2, out_w), jnp.float32)
    head_w = head_w.at[:, :A].set(wa.T)
    head_w = head_w.at[:, A].set(wc)
    head_b = jnp.zeros((out_w,), jnp.float32)
    head_b = head_b.at[:A].set(ba)
    head_b = head_b.at[A].set(bc)

    # Exact pre-composition of the (fully linear) chain.
    Wx = wm.T @ head_w[:P]                          # [S, out_w]
    Wb = head_w[P:P + 2]                            # [2, out_w]
    bias = (bm @ head_w[:P] + head_b)[None, :]      # [1, out_w]
    return {"Wx": Wx, "Wb": Wb, "bias": bias, "action_dim": A}


def actor_critic_forward(x, b, packed):
    """x: [B, seq_len, 1] float32, b: [B, 2] float32."""
    B, S, C = x.shape
    assert C == 1, "stand-in model uses a single input channel"
    Wx, Wb, bias = packed["Wx"], packed["Wb"], packed["bias"]
    A = packed["action_dim"]
    out_w = Wx.shape[1]

    xs = x[..., 0].astype(jnp.float32)   # [B, S]  (no big concat slab)
    bf = b.astype(jnp.float32)           # [B, 2]

    # Batch tiling: 8-aligned, up to 2048 rows/step to amortize ~0.35 us/step
    # grid overhead, but >= 2 steps when possible so the "parallel" axis can
    # shard across v7x's two TensorCores.
    B8 = _round_up(B, 8)
    n_tiles = max(2, _cdiv(B8, 2048))
    Bt = _round_up(_cdiv(B8, n_tiles), 8)
    B_pad = _round_up(B, Bt)
    if B_pad != B:
        xs = jnp.pad(xs, ((0, B_pad - B), (0, 0)))   # zero rows are benign
        bf = jnp.pad(bf, ((0, B_pad - B), (0, 0)))

    kernel = functools.partial(actor_critic_kernel, action_dim=A)
    out = pl.pallas_call(
        kernel,
        out_shape=jax.ShapeDtypeStruct((B_pad, out_w), jnp.bfloat16),
        grid=(B_pad // Bt,),
        in_specs=[
            pl.BlockSpec((Bt, S), lambda i: (i, 0)),      # x tile, streamed
            pl.BlockSpec((Bt, 2), lambda i: (i, 0)),      # b tile, streamed
            pl.BlockSpec((S, out_w), lambda i: (0, 0)),   # resident weights
            pl.BlockSpec((2, out_w), lambda i: (0, 0)),
            pl.BlockSpec((1, out_w), lambda i: (0, 0)),
        ],
        out_specs=pl.BlockSpec((Bt, out_w), lambda i: (i, 0)),
        compiler_params=pltpu.CompilerParams(
            dimension_semantics=("parallel",)),           # megacore-sharded
    )(xs, bf, Wx, Wb, bias)

    probs = out[:B, :A].astype(jnp.float32)
    value = out[:B, A:A + 1].astype(jnp.float32)
    return probs, value


def make_params(seq_len, pred_len, action_dim):
    """Deterministic synthetic parameters (shapes match the PyTorch module)."""
    k = jax.random.PRNGKey(42)
    k1, k2, k3, k4, k5, k6 = jax.random.split(k, 6)
    in_dim = pred_len + 2
    return {
        # stand-in Model: Linear(seq_len -> pred_len)
        "wm": jax.random.normal(k1, (pred_len, seq_len), jnp.float32) * 0.1,
        "bm": jax.random.normal(k2, (1, pred_len), jnp.float32) * 0.1,
        # actor: nn.Linear(pred_len + 2, action_dim)
        "wa": jax.random.normal(k3, (action_dim, in_dim), jnp.float32) * 0.1,
        "ba": jax.random.normal(k4, (1, action_dim), jnp.float32) * 0.1,
        # critic: nn.Linear(pred_len + 2, 1)
        "wc": jax.random.normal(k5, (1, in_dim), jnp.float32) * 0.1,
        "bc": jax.random.normal(k6, (1, 1), jnp.float32) * 0.1,
    }


def reference_forward(x, b, params):
    """Pure-JAX reference mirroring the PyTorch forward."""
    feats = x[..., 0] @ params["wm"].T + params["bm"]          # [B, P]
    c = jnp.concatenate([feats, b], axis=-1)                   # [B, P+2]
    logits = c @ params["wa"].T + params["ba"]
    probs = jax.nn.softmax(logits, axis=-1)
    value = c @ params["wc"].T + params["bc"]
    return probs, value


if __name__ == "__main__":
    B, SEQ_LEN, PRED_LEN, ACTION_DIM = 2, 16, 8, 4

    key = jax.random.PRNGKey(0)
    kx, kb = jax.random.split(key)
    x = jax.random.normal(kx, (B, SEQ_LEN, 1), jnp.float32)
    b = jax.random.normal(kb, (B, 2), jnp.float32)

    params = make_params(SEQ_LEN, PRED_LEN, ACTION_DIM)
    packed = pack_params(params, SEQ_LEN, PRED_LEN, ACTION_DIM)

    probs, value = actor_critic_forward(x, b, packed)
    probs, value = jax.block_until_ready((probs, value))

    ref_probs, ref_value = reference_forward(x, b, params)

    # Shapes match the PyTorch forward; tolerances account for the bf16 store.
    assert probs.shape == (B, ACTION_DIM)
    assert value.shape == (B, 1)
    assert jnp.allclose(jnp.sum(probs, axis=-1), 1.0, atol=2e-2)
    assert jnp.allclose(probs, ref_probs, atol=1e-2)
    assert jnp.allclose(value, ref_value, atol=2e-2, rtol=2e-2)

    print("KERNEL_OK")
</pallas_src>

<mosaic_0001>
module attributes {stable_mosaic.version = 11 : i64} {
  func.func @actor_critic_kernel(%arg0: i32, %arg1: memref<8x16xf32, #tpu.memory_space<vmem>>, %arg2: memref<8x2xf32, #tpu.memory_space<vmem>>, %arg3: memref<16x128xf32, #tpu.memory_space<vmem>>, %arg4: memref<2x128xf32, #tpu.memory_space<vmem>>, %arg5: memref<1x128xf32, #tpu.memory_space<vmem>>, %arg6: memref<8x128xbf16, #tpu.memory_space<vmem>>) attributes {dimension_semantics = [#tpu.dimension_semantics<parallel>], iteration_bounds = array<i64: 1>, scalar_prefetch = 0 : i64, scratch_operands = 0 : i64, tpu.core_type = #tpu.core_type<tc>, window_params = [{transform_indices = @transform_0, window_bounds = array<i64: 8, 16>}, {transform_indices = @transform_1, window_bounds = array<i64: 8, 2>}, {pipeline_mode = #tpu.pipeline_mode<synchronous>, transform_indices = @transform_2, window_bounds = array<i64: 16, 128>}, {pipeline_mode = #tpu.pipeline_mode<synchronous>, transform_indices = @transform_3, window_bounds = array<i64: 2, 128>}, {pipeline_mode = #tpu.pipeline_mode<synchronous>, transform_indices = @transform_4, window_bounds = array<i64: 1, 128>}, {transform_indices = @transform_5, window_bounds = array<i64: 8, 128>}]} {
    %c0 = arith.constant 0 : index
    %c0_0 = arith.constant 0 : index
    %0 = vector.load %arg1[%c0, %c0_0] : memref<8x16xf32, #tpu.memory_space<vmem>>, vector<8x16xf32>
    %c0_1 = arith.constant 0 : index
    %c0_2 = arith.constant 0 : index
    %1 = vector.load %arg3[%c0_1, %c0_2] : memref<16x128xf32, #tpu.memory_space<vmem>>, vector<16x128xf32>
    %cst = arith.constant dense<0.000000e+00> : vector<8x128xf32>
    %2 = tpu.matmul %0, %1, %cst {dimension_numbers = #tpu.dot_dimension_numbers<[1], [0], [0], [1], [0, 0, 1, 1], [], []>} : vector<8x16xf32>, vector<16x128xf32>, vector<8x128xf32> -> vector<8x128xf32>
    %c0_3 = arith.constant 0 : index
    %c0_4 = arith.constant 0 : index
    %3 = vector.load %arg2[%c0_3, %c0_4] : memref<8x2xf32, #tpu.memory_space<vmem>>, vector<8x2xf32>
    %c0_5 = arith.constant 0 : index
    %c0_6 = arith.constant 0 : index
    %4 = vector.load %arg4[%c0_5, %c0_6] : memref<2x128xf32, #tpu.memory_space<vmem>>, vector<2x128xf32>
    %cst_7 = arith.constant dense<0.000000e+00> : vector<8x128xf32>
    %5 = tpu.matmul %3, %4, %cst_7 {dimension_numbers = #tpu.dot_dimension_numbers<[1], [0], [0], [1], [0, 0, 1, 1], [], []>} : vector<8x2xf32>, vector<2x128xf32>, vector<8x128xf32> -> vector<8x128xf32>
    %6 = arith.addf %2, %5 : vector<8x128xf32>
    %c0_8 = arith.constant 0 : index
    %c0_9 = arith.constant 0 : index
    %7 = vector.load %arg5[%c0_8, %c0_9] : memref<1x128xf32, #tpu.memory_space<vmem>>, vector<1x128xf32>
    %8 = vector.broadcast %7 : vector<1x128xf32> to vector<8x128xf32>
    %9 = arith.addf %6, %8 : vector<8x128xf32>
    %10 = tpu.iota {dimensions = array<i32: 1>} : vector<8x128xi32>
    %c4_i32 = arith.constant 4 : i32
    %11 = vector.broadcast %c4_i32 : i32 to vector<8x128xi32>
    %12 = arith.cmpi slt, %10, %11 : vector<8x128xi32>
    %cst_10 = arith.constant 0xFF800000 : f32
    %13 = vector.broadcast %cst_10 : f32 to vector<8x128xf32>
    %14 = arith.select %12, %9, %13 : vector<8x128xi1>, vector<8x128xf32>
    %cst_11 = arith.constant dense<0xFF800000> : vector<8xf32>
    %15 = vector.multi_reduction <maximumf>, %14, %cst_11 [1] : vector<8x128xf32> to vector<8xf32>
    %16 = vector.shape_cast %15 : vector<8xf32> to vector<8x1xf32>
    %17 = vector.broadcast %16 : vector<8x1xf32> to vector<8x128xf32>
    %18 = arith.subf %14, %17 : vector<8x128xf32>
    %19 = math.exp %18 : vector<8x128xf32>
    %cst_12 = arith.constant dense<0.000000e+00> : vector<8xf32>
    %20 = vector.multi_reduction <add>, %19, %cst_12 [1] : vector<8x128xf32> to vector<8xf32>
    %21 = vector.shape_cast %20 : vector<8xf32> to vector<8x1xf32>
    %22 = vector.broadcast %21 : vector<8x1xf32> to vector<8x128xf32>
    %23 = arith.divf %19, %22 : vector<8x128xf32>
    %24 = arith.select %12, %23, %9 : vector<8x128xi1>, vector<8x128xf32>
    %25 = arith.truncf %24 : vector<8x128xf32> to vector<8x128xbf16>
    %c0_13 = arith.constant 0 : index
    %c0_14 = arith.constant 0 : index
    %26 = vector.load %arg6[%c0_13, %c0_14] : memref<8x128xbf16, #tpu.memory_space<vmem>>, vector<8x128xbf16>
    tpu.vector_store %arg6[%c0_13, %c0_14], %25 {strides = array<i32>} : memref<8x128xbf16, #tpu.memory_space<vmem>>, vector<8x128xbf16>,
    return
  }
  func.func @transform_0(%arg0: i32) -> (i32, i32) {
    %c0_i32 = arith.constant 0 : i32
    %c0_i32_0 = arith.constant 0 : i32
    return %arg0, %c0_i32 : i32, i32
  }
  func.func @transform_1(%arg0: i32) -> (i32, i32) {
    %c0_i32 = arith.constant 0 : i32
    %c0_i32_0 = arith.constant 0 : i32
    return %arg0, %c0_i32 : i32, i32
  }
  func.func @transform_2(%arg0: i32) -> (i32, i32) {
    %c0_i32 = arith.constant 0 : i32
    %c0_i32_0 = arith.constant 0 : i32
    %c0_i32_1 = arith.constant 0 : i32
    return %c0_i32, %c0_i32_0 : i32, i32
  }
  func.func @transform_3(%arg0: i32) -> (i32, i32) {
    %c0_i32 = arith.constant 0 : i32
    %c0_i32_0 = arith.constant 0 : i32
    %c0_i32_1 = arith.constant 0 : i32
    return %c0_i32, %c0_i32_0 : i32, i32
  }
  func.func @transform_4(%arg0: i32) -> (i32, i32) {
    %c0_i32 = arith.constant 0 : i32
    %c0_i32_0 = arith.constant 0 : i32
    %c0_i32_1 = arith.constant 0 : i32
    return %c0_i32, %c0_i32_0 : i32, i32
  }
  func.func @transform_5(%arg0: i32) -> (i32, i32) {
    %c0_i32 = arith.constant 0 : i32
    %c0_i32_0 = arith.constant 0 : i32
    return %arg0, %c0_i32 : i32, i32
  }
}

</mosaic_0001>

<llo_original>
// kernel: tpu_custom_call.1
$region0: #{tpu_custom_call.1}
  #allocation0 [shape = 'u32[]', space=smem, size = 0x4, offset = 0x4, fixed_abs, tag = 'smem constant byte address 0x4 - core index']
  #allocation1 [shape = 'u32[72,128]{1,0:T(1,128)}', space=vmem, size = 0x9000, scoped, tag = 'internal scratch']
  %s0 = inlined_call_operand.vmem [shape: f32[8,16], index: 0, kind: input, shape index: {}]
  %s1 = inlined_call_operand.vmem [shape: f32[8,2], index: 1, kind: input, shape index: {}]
  %s2 = inlined_call_operand.hbm [shape: f32[16,128], index: 2, kind: input, shape index: {}]
  %s3 = inlined_call_operand.vmem [shape: f32[2,128], index: 3, kind: input, shape index: {}]
  %s4 = inlined_call_operand.vmem [shape: f32[1,128], index: 4, kind: input, shape index: {}]
  %s5 = inlined_call_operand.hbm [shape: bf16[8,128], index: 5, kind: output, shape index: {}]
  %s6 = sld [smem:[#allocation0]]
  $region34: #{tpu_custom_call.1} parent=0
    _
  %s8 = ssub.s32 1, %s6
  %s9 = scalar_select 0, %s8, %s6
  $region1: #{tpu_custom_call.1} parent=0
    #allocation2 [shape = 'u8[8192]{0}', space=vmem, size = 0x2000, scoped, tag = 'input window, operand 2, single buffered']
    #allocation3 [shape = 's32[1]{0}', space=sflag, size = 0x4, scoped, tag = 'scoped memory for tpu_custom_call.1']
    #allocation4 [shape = 's32[1]{0}', space=sflag, size = 0x4, scoped, tag = 'scoped memory for tpu_custom_call.1']
    #allocation5 [shape = 'u8[2048]{0}', space=vmem, size = 0x800, scoped, tag = 'output window, operand 0, single buffered']
    %10 = vsyncpa [#allocation3], 0
    %11 = vsyncpa [#allocation4], 0
    // Predicated region
    $region2: #{tpu_custom_call.1} parent=1 // pred_check
      _
    $region3: #{tpu_custom_call.1} parent=1 // pred_check_branch
      %13 = sbr.rel (0) target = $region5
    $region4: #{tpu_custom_call.1} parent=1 // pred_region
      _
    $region5: #{tpu_custom_call.1} parent=1 // pred_fallthru
      _
    // Predicated region
    $region6: #{tpu_custom_call.1} parent=1 // pred_check
      _
    $region7: #{tpu_custom_call.1} parent=1 // pred_check_branch
      %15 = sbr.rel (0) target = $region9
    $region8: #{tpu_custom_call.1} parent=1 // pred_region
      _
    $region9: #{tpu_custom_call.1} parent=1 // pred_fallthru
      _
    // Predicated region
    $region10: #{tpu_custom_call.1} parent=1 // pred_check
      _
    $region11: #{tpu_custom_call.1} parent=1 // pred_check_branch
      %17 = sbr.rel (0) target = $region13
    $region12: #{tpu_custom_call.1} parent=1 // pred_region
      %19 = vsyncadd [#allocation3], 0
      %s20 = sshll.u32 %s2, 4
      %s21 = int_to_ptr.hbm [resolvable:$true] %s20
      %s22 = sshll.u32 [#allocation2], 4
      %s23 = int_to_ptr.vmem [resolvable:$true] %s22
      %28 = dma.hbm_to_vmem [thread:$0]  %s21, 256, %s23, [#allocation3], 128, 128, 8
    $region13: #{tpu_custom_call.1} parent=1 // pred_fallthru
      _
    // Predicated region
    $region14: #{tpu_custom_call.1} parent=1 // pred_check
      _
    $region15: #{tpu_custom_call.1} parent=1 // pred_check_branch
      %30 = sbr.rel (0) target = $region17
    $region16: #{tpu_custom_call.1} parent=1 // pred_region
      _
    $region17: #{tpu_custom_call.1} parent=1 // pred_fallthru
      _
    // Predicated region
    $region18: #{tpu_custom_call.1} parent=1 // pred_check
      _
    $region19: #{tpu_custom_call.1} parent=1 // pred_check_branch
      %32 = sbr.rel (0) target = $region21
    $region20: #{tpu_custom_call.1} parent=1 // pred_region
      _
    $region21: #{tpu_custom_call.1} parent=1 // pred_fallthru
      _
    // Predicated region
    $region22: #{tpu_custom_call.1} parent=1 // pred_check
      _
    $region23: #{tpu_custom_call.1} parent=1 // pred_check_branch
      %34 = sbr.rel (0) target = $region25
    $region24: #{tpu_custom_call.1} parent=1 // pred_region
      %36 = dma.done [#allocation3], 256
    $region25: #{tpu_custom_call.1} parent=1 // pred_fallthru
      _
    %v37 = vld [vmem:[%s0] sm:$0xff]
    %v38 = vld [vmem:[#allocation2] sm:$0xff]
    %v39 = vld [vmem:[#allocation2 + $0x8] sm:$0xff]
    %v40 = vld [vmem:[%s1] sm:$0xff]
    %v41 = vld [vmem:[%s3] sm:$0x3]
    %vm42 = vcmask 15360
    %v44 = vsel %vm42, %v40, 0
    %vm46 = vcmask 1041408
    %v48 = vsel %vm46, %v41, 0
    %50 = vmatpush.msra.mxu0 0.0
    %51 = vmatpush.msra.mxu0 0.0
    %52 = vmatpush.msra.mxu0 0.0
    %53 = vmatpush.msra.mxu0 0.0
    %54 = vmatpush.msra.mxu0 0.0
    %55 = vmatpush.msra.mxu0 0.0
    %56 = vmatpush.msra.mxu0 0.0
    %57 = vmatpush.msra.mxu0 0.0
    %58 = vmatpush.msra.mxu0 0.0
    %59 = vmatpush.msra.mxu0 0.0
    %60 = vmatpush.msra.mxu0 0.0
    %61 = vmatpush.msra.mxu0 0.0
    %62 = vmatpush.msra.mxu0 0.0
    %63 = vmatpush.msra.mxu0 0.0
    %64 = vmatpush.msra.mxu0 0.0
    %65 = vmatpush.msra.mxu0 %v48
    %66 = vmatmul.f32.gmra.mxu0 %v44
    %v67 = vpop.f32.mrf.mxu0
    %v68 = vadd.f32 0.0, %v67
    %69 = vdwg.mxu0
    %vm70 = vcmask 130048
    %v72 = vsel %vm70, %v37, 0
    %74 = vmatpush.msra.mxu0 0.0
    %75 = vmatpush.msra.mxu0 0.0
    %76 = vmatpush.msra.mxu0 0.0
    %77 = vmatpush.msra.mxu0 0.0
    %78 = vmatpush.msra.mxu0 0.0
    %79 = vmatpush.msra.mxu0 0.0
    %80 = vmatpush.msra.mxu0 0.0
    %81 = vmatpush.msra.mxu0 0.0
    %82 = vmatpush.msra.mxu0 0.0
    %83 = vmatpush.msra.mxu0 0.0
    %84 = vmatpush.msra.mxu0 0.0
    %85 = vmatpush.msra.mxu0 0.0
    %86 = vmatpush.msra.mxu0 0.0
    %87 = vmatpush.msra.mxu0 0.0
    %88 = vmatpush.msra.mxu0 %v39
    %89 = vmatpush.msra.mxu0 %v38
    %90 = vmatmul.f32.gmra.mxu0 %v72
    %v91 = vpop.f32.mrf.mxu0
    %v92 = vadd.f32 %v68, %v91
    %93 = vdwg.mxu0
    %v94 = vld [vmem:[%s4] sm:$0x1]
    %v96 = vperm.slane %v94, 0
    %v98 = vadd.f32 %v92, %v96
    %v99 = vlaneseq
    %v100 = vand.u32 %v99, 127
    %vm101 = vcmp.lt.s32.totalorder %v100, 4
    %v102 = vsel %vm101, %v98, -inf
    %103 = vmax.xlane.f32.xlu0 %v102
    %v104 = vpop.xlane.xlu0 %103
    %v105 = vsub.f32 %v102, %v104
    %v106 = vmul.f32 %v105, 1.442695
    %v107 = vpow.pop %v106
    %108 = vadd.xlane.f32.xlu0 %v107
    %v109 = vpop.xlane.xlu0 %108
    %v110 = vrcp.pop %v109
    %v111 = vmul.f32 %v109, %v110
    %v112 = vsub.f32 1.0, %v111
    %v113 = vmul.f32 %v110, %v112
    %v114 = vadd.f32 %v110, %v113
    %vm115 = vweird.f32 %v109
    %vm116 = vweird.f32 %v110
    %vm117 = vmor %vm115, %vm116
    %v118 = vsel %vm117, %v110, %v114
    %v119 = vand.u32 2147483647, %v109
    %vm120 = vcmp.eq.f32.partialorder %v119, 8.507059e+37
    %v121 = vand.u32 %v109, 2147483648
    %v122 = vor.u32 1.1754944e-38, %v121
    %v123 = vsel %vm120, %v122, %v118
    %v124 = vmul.f32 %v107, %v123
    %v125 = vsel %vm101, %v124, %v98
    %v126 = vpack.c.bf16 %v125, %v125
    %127 = vst [vmem:[#allocation5] sm:$0xf] %v126
    // Predicated region
    $region26: #{tpu_custom_call.1} parent=1 // pred_check
      _
    $region27: #{tpu_custom_call.1} parent=1 // pred_check_branch
      %129 = sbr.rel (0) target = $region29
    $region28: #{tpu_custom_call.1} parent=1 // pred_region
      %131 = vsyncadd [#allocation4], 0
      %s133 = sshll.u32 [#allocation5], 4
      %s134 = int_to_ptr.vmem [resolvable:$true] %s133
      %s135 = sshll.u32 %s5, 4
      %s136 = int_to_ptr.hbm [resolvable:$true] %s135
      %138 = dma.vmem_to_hbm [thread:$0]  %s134, 64, %s136, [#allocation4]
    $region29: #{tpu_custom_call.1} parent=1 // pred_fallthru
      _
    // Predicated region
    $region30: #{tpu_custom_call.1} parent=1 // pred_check
      _
    $region31: #{tpu_custom_call.1} parent=1 // pred_check_branch
      %140 = sbr.rel (0) target = $region33
    $region32: #{tpu_custom_call.1} parent=1 // pred_region
      %142 = dma.done [#allocation4], 64
    $region33: #{tpu_custom_call.1} parent=1 // pred_fallthru
      _
    %143 = vsyncpa [#allocation3], 1
    %144 = vsyncpa [#allocation4], 1

</llo_original>
